<compile_context>
chip_gen: v7x
topology: tpu7x:2x2x1
jax: 0.10.0
libtpu: 0.0.40
codegen_flags: <defaults>
</compile_context>

<pallas_src>
import functools

import jax
import jax.numpy as jnp
from jax.experimental import pallas as pl
from jax.experimental.pallas import tpu as pltpu


def _contrastive_kernel(score_ref, label_ref, lse_ref, simcol_ref,
                        m_sc, l_sc, sim_sc, *, gamma, binary_label,
                        rows_valid, tile_n):
    ni = pl.program_id(1)

    @pl.when(ni == 0)
    def _init():
        m_sc[...] = jnp.full_like(m_sc, -jnp.inf)
        l_sc[...] = jnp.zeros_like(l_sc)
        sim_sc[...] = jnp.zeros_like(sim_sc)

    s = score_ref[...].astype(jnp.float32) * gamma      # score *= gamma (f32 math)
    lab = label_ref[...]                                 # raw (int8 / bool / f32)
    mask = lab != 0                                      # no f32 upcast of labels

    # sim partial: per-column sum of (score*gamma * label).
    if binary_label:
        # labels guaranteed 0/1 -> reuse the mask, saves the cast + multiply.
        pos = jnp.where(mask, s, 0.0)
    else:
        # faithful to PyTorch for arbitrary label values.
        pos = s * lab.astype(jnp.float32)
    sim_sc[...] += jnp.sum(pos, axis=0, keepdims=True)

    # neg_sim = score*gamma * label.logical_not(): positive slots become 0.0
    neg = jnp.where(mask, 0.0, s)                        # (tn, tm), fused in vregs

    if rows_valid is not None:
        # Wrapper zero-pads N up to a tile multiple; padded rows must not
        # contribute to the logsumexp (exp(-inf) == 0).
        row = jax.lax.broadcasted_iota(jnp.int32, neg.shape, 0) + ni * tile_n
        neg = jnp.where(row < rows_valid, neg, -jnp.inf)

    # Online (numerically stable) logsumexp over rows (dim=0).
    tile_max = jnp.max(neg, axis=0, keepdims=True)        # (1, tm)
    m_prev = m_sc[...]
    m_new = jnp.maximum(m_prev, tile_max)
    l_sc[...] = (jnp.exp(m_prev - m_new) * l_sc[...]
                 + jnp.sum(jnp.exp(neg - m_new), axis=0, keepdims=True))
    m_sc[...] = m_new

    @pl.when(ni == pl.num_programs(1) - 1)
    def _finalize():
        lse_ref[...] = m_sc[...] + jnp.log(l_sc[...])      # lane-dense (1, tm)
        simcol_ref[...] = sim_sc[...]                      # lane-dense (1, tm)


def _round_up(x, m):
    return ((x + m - 1) // m) * m


def contrastive_loss(score, label, margin=0.2, gamma=5.0,
                     tile_n=512, tile_m=1024, binary_label=None):
    """Pallas TPU ContrastiveLoss forward.

    binary_label: True if labels are strictly 0/1 (enables the cheaper masked
    sim path). None -> inferred True only for bool labels.
    """
    N, M = score.shape
    assert label.shape == (N, M)

    if binary_label is None:
        binary_label = jnp.issubdtype(label.dtype, jnp.bool_)
    binary_label = bool(binary_label)
    if binary_label and jnp.dtype(label.dtype).itemsize > 1:
        # Narrow labels cut HBM traffic ~4x on the mem-bound generations;
        # ideally the producer emits int8/bool so this cast is a no-op.
        label = label.astype(jnp.int8)

    itemsize = jnp.dtype(label.dtype).itemsize
    row_align = 32 if itemsize == 1 else (16 if itemsize == 2 else 8)

    # Tile selection (aligned to (row_align, 128)); non-divisible shapes are
    # padded below instead of falling back to full-extent blocks.
    tn = min(int(tile_n), _round_up(N, row_align))
    tn = max(tn - tn % row_align, row_align)
    tm = min(int(tile_m), _round_up(M, 128))
    tm = max(tm - tm % 128, 128)

    N_pad = _round_up(N, tn)
    M_pad = _round_up(M, tm)

    # Keep >= 2 column tiles when possible so the "parallel" mi axis can shard
    # across both v7x TensorCores (harmless on single-TC v5e/v6e).
    if M_pad // tm == 1 and tm % 256 == 0:
        tm //= 2

    if (N_pad, M_pad) != (N, M):
        # Zero padding: padded elements contribute 0 to sim automatically;
        # padded rows are masked to -inf in-kernel, padded columns sliced off.
        score = jnp.pad(score, ((0, N_pad - N), (0, M_pad - M)))
        label = jnp.pad(label, ((0, N_pad - N), (0, M_pad - M)))

    gm, gn = M_pad // tm, N_pad // tn
    rows_valid = None if N_pad == N else int(N)

    # VMEM budget: double-buffered score + label tiles, outputs, scratch.
    est = (2 * tn * tm * 4
           + 2 * tn * tm * itemsize
           + 2 * 2 * tm * 4
           + 3 * tm * 4)
    vmem_limit = int(min(48 << 20, max(2 * est, 16 << 20)))  # stay under v7x 64 MiB

    kernel = functools.partial(_contrastive_kernel, gamma=float(gamma),
                               binary_label=binary_label,
                               rows_valid=rows_valid, tile_n=tn)

    lse, sim_cols = pl.pallas_call(
        kernel,
        out_shape=(jax.ShapeDtypeStruct((1, M_pad), jnp.float32),
                   jax.ShapeDtypeStruct((1, M_pad), jnp.float32)),
        grid=(gm, gn),                                       # reduction axis innermost
        in_specs=[
            pl.BlockSpec((tn, tm), lambda mi, ni: (ni, mi)),  # score tile
            pl.BlockSpec((tn, tm), lambda mi, ni: (ni, mi)),  # label tile
        ],
        out_specs=(
            pl.BlockSpec((1, tm), lambda mi, ni: (0, mi)),    # per-column lse
            pl.BlockSpec((1, tm), lambda mi, ni: (0, mi)),    # per-column sim partial
        ),
        scratch_shapes=[
            pltpu.VMEM((1, tm), jnp.float32),   # running max
            pltpu.VMEM((1, tm), jnp.float32),   # running sum-exp
            pltpu.VMEM((1, tm), jnp.float32),   # running sim partial
        ],
        compiler_params=pltpu.CompilerParams(
            dimension_semantics=("parallel", "arbitrary"),
            vmem_limit_bytes=vmem_limit),
    )(score, label)

    # Global finalize (needs the global sim, only known after the whole grid).
    sim = jnp.sum(sim_cols)                     # padded cols/rows contribute 0
    lse_valid = lse[0, :M]                      # drop padded columns
    return jnp.sum(jnp.maximum(lse_valid - sim + margin, 0.0))


def _reference(score, label, margin=0.2, gamma=5.0):
    s = score.astype(jnp.float32) * gamma
    lab = label.astype(jnp.float32)
    sim = jnp.sum(s * lab)
    neg = jnp.where(lab != 0.0, 0.0, s)
    lse = jax.scipy.special.logsumexp(neg, axis=0)
    return jnp.sum(jnp.maximum(lse - sim + margin, 0.0))


if __name__ == "__main__":
    key = jax.random.PRNGKey(0)
    k1, k2, k3, k4 = jax.random.split(key, 4)

    # Test 1: tile-aligned shapes, int8 binary labels (narrow-label fast path).
    N, M = 128, 512
    score1 = jax.random.normal(k1, (N, M), dtype=jnp.float32)
    label1 = (jax.random.uniform(k2, (N, M)) < 0.05).astype(jnp.int8)
    loss1 = contrastive_loss(score1, label1, margin=0.2, gamma=5.0,
                             tile_n=64, tile_m=256, binary_label=True)
    jax.block_until_ready(loss1)
    ref1 = _reference(score1, label1, margin=0.2, gamma=5.0)
    assert jnp.allclose(loss1, ref1, rtol=1e-4, atol=1e-3), (loss1, ref1)

    # Test 2: non-aligned shapes (padded + masked partial tiles) with float
    # labels that are not strictly 0/1 (exercises the faithful score*label path).
    N2, M2 = 100, 384
    score2 = jax.random.normal(k3, (N2, M2), dtype=jnp.float32)
    label2 = jnp.where(jax.random.uniform(k4, (N2, M2)) < 0.05, 2.0, 0.0
                       ).astype(jnp.float32)
    loss2 = contrastive_loss(score2, label2, margin=0.2, gamma=5.0,
                             tile_n=64, tile_m=256)
    jax.block_until_ready(loss2)
    ref2 = _reference(score2, label2, margin=0.2, gamma=5.0)
    assert jnp.allclose(loss2, ref2, rtol=1e-4, atol=1e-3), (loss2, ref2)

    print("KERNEL_OK")
</pallas_src>

<mosaic_0001>
module attributes {stable_mosaic.version = 11 : i64} {
  func.func @_contrastive_kernel(%arg0: i32, %arg1: i32, %arg2: memref<64x256xf32, #tpu.memory_space<vmem>>, %arg3: memref<64x256xi8, #tpu.memory_space<vmem>>, %arg4: memref<1x256xf32, #tpu.memory_space<vmem>>, %arg5: memref<1x256xf32, #tpu.memory_space<vmem>>, %arg6: memref<1x256xf32, #tpu.memory_space<vmem>>, %arg7: memref<1x256xf32, #tpu.memory_space<vmem>>, %arg8: memref<1x256xf32, #tpu.memory_space<vmem>>) attributes {dimension_semantics = [#tpu.dimension_semantics<parallel>, #tpu.dimension_semantics<arbitrary>], iteration_bounds = array<i64: 2, 2>, scalar_prefetch = 0 : i64, scratch_operands = 3 : i64, tpu.core_type = #tpu.core_type<tc>, window_params = [{transform_indices = @transform_0, window_bounds = array<i64: 64, 256>}, {transform_indices = @transform_1, window_bounds = array<i64: 64, 256>}, {transform_indices = @transform_2, window_bounds = array<i64: 1, 256>}, {transform_indices = @transform_3, window_bounds = array<i64: 1, 256>}]} {
    %c0_i32 = arith.constant 0 : i32
    %0 = arith.cmpi eq, %arg1, %c0_i32 : i32
    %1 = arith.extui %0 : i1 to i32
    %c0_i32_0 = arith.constant 0 : i32
    %2 = arith.cmpi ne, %1, %c0_i32_0 : i32
    scf.if %2 {
      %cst_22 = arith.constant 0xFF800000 : f32
      %37 = vector.broadcast %cst_22 : f32 to vector<1x256xf32>
      %c0_23 = arith.constant 0 : index
      %c0_24 = arith.constant 0 : index
      %38 = vector.load %arg6[%c0_23, %c0_24] : memref<1x256xf32, #tpu.memory_space<vmem>>, vector<1x256xf32>
      tpu.vector_store %arg6[%c0_23, %c0_24], %37 {strides = array<i32>} : memref<1x256xf32, #tpu.memory_space<vmem>>, vector<1x256xf32>,
      %cst_25 = arith.constant 0.000000e+00 : f32
      %39 = vector.broadcast %cst_25 : f32 to vector<1x256xf32>
      %c0_26 = arith.constant 0 : index
      %c0_27 = arith.constant 0 : index
      %40 = vector.load %arg7[%c0_26, %c0_27] : memref<1x256xf32, #tpu.memory_space<vmem>>, vector<1x256xf32>
      tpu.vector_store %arg7[%c0_26, %c0_27], %39 {strides = array<i32>} : memref<1x256xf32, #tpu.memory_space<vmem>>, vector<1x256xf32>,
      %cst_28 = arith.constant 0.000000e+00 : f32
      %41 = vector.broadcast %cst_28 : f32 to vector<1x256xf32>
      %c0_29 = arith.constant 0 : index
      %c0_30 = arith.constant 0 : index
      %42 = vector.load %arg8[%c0_29, %c0_30] : memref<1x256xf32, #tpu.memory_space<vmem>>, vector<1x256xf32>
      tpu.vector_store %arg8[%c0_29, %c0_30], %41 {strides = array<i32>} : memref<1x256xf32, #tpu.memory_space<vmem>>, vector<1x256xf32>,
    } else {
    }
    %c0 = arith.constant 0 : index
    %c0_1 = arith.constant 0 : index
    %3 = vector.load %arg2[%c0, %c0_1] : memref<64x256xf32, #tpu.memory_space<vmem>>, vector<64x256xf32>
    %cst = arith.constant 5.000000e+00 : f32
    %4 = vector.broadcast %cst : f32 to vector<64x256xf32>
    %5 = arith.mulf %3, %4 : vector<64x256xf32>
    %c0_2 = arith.constant 0 : index
    %c0_3 = arith.constant 0 : index
    %6 = vector.load %arg3[%c0_2, %c0_3] : memref<64x256xi8, #tpu.memory_space<vmem>>, vector<64x256xi8>
    %c0_i8 = arith.constant 0 : i8
    %7 = vector.broadcast %c0_i8 : i8 to vector<64x256xi8>
    %8 = arith.cmpi ne, %6, %7 : vector<64x256xi8>
    %cst_4 = arith.constant 0.000000e+00 : f32
    %9 = vector.broadcast %cst_4 : f32 to vector<64x256xf32>
    %10 = arith.select %8, %5, %9 : vector<64x256xi1>, vector<64x256xf32>
    %c0_5 = arith.constant 0 : index
    %c0_6 = arith.constant 0 : index
    %11 = vector.load %arg8[%c0_5, %c0_6] : memref<1x256xf32, #tpu.memory_space<vmem>>, vector<1x256xf32>
    %cst_7 = arith.constant dense<0.000000e+00> : vector<256xf32>
    %12 = vector.multi_reduction <add>, %10, %cst_7 [0] : vector<64x256xf32> to vector<256xf32>
    %13 = vector.shape_cast %12 : vector<256xf32> to vector<1x256xf32>
    %14 = arith.addf %11, %13 : vector<1x256xf32>
    %c0_8 = arith.constant 0 : index
    %c0_9 = arith.constant 0 : index
    %15 = vector.load %arg8[%c0_8, %c0_9] : memref<1x256xf32, #tpu.memory_space<vmem>>, vector<1x256xf32>
    tpu.vector_store %arg8[%c0_8, %c0_9], %14 {strides = array<i32>} : memref<1x256xf32, #tpu.memory_space<vmem>>, vector<1x256xf32>,
    %cst_10 = arith.constant 0.000000e+00 : f32
    %16 = vector.broadcast %cst_10 : f32 to vector<64x256xf32>
    %17 = arith.select %8, %16, %5 : vector<64x256xi1>, vector<64x256xf32>
    %cst_11 = arith.constant dense<0xFF800000> : vector<256xf32>
    %18 = vector.multi_reduction <maximumf>, %17, %cst_11 [0] : vector<64x256xf32> to vector<256xf32>
    %19 = vector.shape_cast %18 : vector<256xf32> to vector<1x256xf32>
    %c0_12 = arith.constant 0 : index
    %c0_13 = arith.constant 0 : index
    %20 = vector.load %arg6[%c0_12, %c0_13] : memref<1x256xf32, #tpu.memory_space<vmem>>, vector<1x256xf32>
    %21 = arith.maximumf %20, %19 : vector<1x256xf32>
    %22 = arith.subf %20, %21 : vector<1x256xf32>
    %23 = math.exp %22 : vector<1x256xf32>
    %c0_14 = arith.constant 0 : index
    %c0_15 = arith.constant 0 : index
    %24 = vector.load %arg7[%c0_14, %c0_15] : memref<1x256xf32, #tpu.memory_space<vmem>>, vector<1x256xf32>
    %25 = arith.mulf %23, %24 : vector<1x256xf32>
    %26 = vector.broadcast %21 : vector<1x256xf32> to vector<64x256xf32>
    %27 = arith.subf %17, %26 : vector<64x256xf32>
    %28 = math.exp %27 : vector<64x256xf32>
    %cst_16 = arith.constant dense<0.000000e+00> : vector<256xf32>
    %29 = vector.multi_reduction <add>, %28, %cst_16 [0] : vector<64x256xf32> to vector<256xf32>
    %30 = vector.shape_cast %29 : vector<256xf32> to vector<1x256xf32>
    %31 = arith.addf %25, %30 : vector<1x256xf32>
    %c0_17 = arith.constant 0 : index
    %c0_18 = arith.constant 0 : index
    %32 = vector.load %arg7[%c0_17, %c0_18] : memref<1x256xf32, #tpu.memory_space<vmem>>, vector<1x256xf32>
    tpu.vector_store %arg7[%c0_17, %c0_18], %31 {strides = array<i32>} : memref<1x256xf32, #tpu.memory_space<vmem>>, vector<1x256xf32>,
    %c0_19 = arith.constant 0 : index
    %c0_20 = arith.constant 0 : index
    %33 = vector.load %arg6[%c0_19, %c0_20] : memref<1x256xf32, #tpu.memory_space<vmem>>, vector<1x256xf32>
    tpu.vector_store %arg6[%c0_19, %c0_20], %21 {strides = array<i32>} : memref<1x256xf32, #tpu.memory_space<vmem>>, vector<1x256xf32>,
    %c1_i32 = arith.constant 1 : i32
    %34 = arith.cmpi eq, %arg1, %c1_i32 : i32
    %35 = arith.extui %34 : i1 to i32
    %c0_i32_21 = arith.constant 0 : i32
    %36 = arith.cmpi ne, %35, %c0_i32_21 : i32
    scf.if %36 {
      %c0_22 = arith.constant 0 : index
      %c0_23 = arith.constant 0 : index
      %37 = vector.load %arg6[%c0_22, %c0_23] : memref<1x256xf32, #tpu.memory_space<vmem>>, vector<1x256xf32>
      %c0_24 = arith.constant 0 : index
      %c0_25 = arith.constant 0 : index
      %38 = vector.load %arg7[%c0_24, %c0_25] : memref<1x256xf32, #tpu.memory_space<vmem>>, vector<1x256xf32>
      %39 = math.log %38 : vector<1x256xf32>
      %40 = arith.addf %37, %39 : vector<1x256xf32>
      %c0_26 = arith.constant 0 : index
      %c0_27 = arith.constant 0 : index
      %41 = vector.load %arg4[%c0_26, %c0_27] : memref<1x256xf32, #tpu.memory_space<vmem>>, vector<1x256xf32>
      tpu.vector_store %arg4[%c0_26, %c0_27], %40 {strides = array<i32>} : memref<1x256xf32, #tpu.memory_space<vmem>>, vector<1x256xf32>,
      %c0_28 = arith.constant 0 : index
      %c0_29 = arith.constant 0 : index
      %42 = vector.load %arg8[%c0_28, %c0_29] : memref<1x256xf32, #tpu.memory_space<vmem>>, vector<1x256xf32>
      %c0_30 = arith.constant 0 : index
      %c0_31 = arith.constant 0 : index
      %43 = vector.load %arg5[%c0_30, %c0_31] : memref<1x256xf32, #tpu.memory_space<vmem>>, vector<1x256xf32>
      tpu.vector_store %arg5[%c0_30, %c0_31], %42 {strides = array<i32>} : memref<1x256xf32, #tpu.memory_space<vmem>>, vector<1x256xf32>,
    } else {
    }
    return
  }
  func.func @transform_0(%arg0: i32, %arg1: i32) -> (i32, i32) {
    %c0_i32 = arith.constant 0 : i32
    return %arg1, %arg0 : i32, i32
  }
  func.func @transform_1(%arg0: i32, %arg1: i32) -> (i32, i32) {
    %c0_i32 = arith.constant 0 : i32
    return %arg1, %arg0 : i32, i32
  }
  func.func @transform_2(%arg0: i32, %arg1: i32) -> (i32, i32) {
    %c0_i32 = arith.constant 0 : i32
    %c0_i32_0 = arith.constant 0 : i32
    return %c0_i32, %arg0 : i32, i32
  }
  func.func @transform_3(%arg0: i32, %arg1: i32) -> (i32, i32) {
    %c0_i32 = arith.constant 0 : i32
    %c0_i32_0 = arith.constant 0 : i32
    return %c0_i32, %arg0 : i32, i32
  }
}

</mosaic_0001>

<llo_original>
// kernel: tpu_custom_call.1
$region0: #{tpu_custom_call.1}
  #allocation0 [shape = 'u32[]', space=smem, size = 0x4, offset = 0x4, fixed_abs, tag = 'smem constant byte address 0x4 - core index']
  #allocation1 [shape = 'u32[144,128]{1,0:T(1,128)}', space=vmem, size = 0x12000, scoped, tag = 'internal scratch']
  #allocation2 [shape = 'f32[1,256]{1,0:T(1,128)}', space=vmem, size = 0x400, scoped, tag = 'scratch operand']
  #allocation3 [shape = 'f32[1,256]{1,0:T(1,128)}', space=vmem, size = 0x400, scoped, tag = 'scratch operand']
  #allocation4 [shape = 'f32[1,256]{1,0:T(1,128)}', space=vmem, size = 0x400, scoped, tag = 'scratch operand']
  %s0 = inlined_call_operand.hbm [shape: f32[128,512], index: 0, kind: input, shape index: {}]
  %s1 = inlined_call_operand.hbm [shape: s8[128,512], index: 1, kind: input, shape index: {}]
  %s2 = inlined_call_operand.hbm [shape: f32[1,512], index: 2, kind: output, shape index: {0}]
  %s3 = inlined_call_operand.hbm [shape: f32[1,512], index: 3, kind: output, shape index: {1}]
  %4 = xla_tuple %s2, %s3
  %s5 = sld [smem:[#allocation0]]
  $region65: #{tpu_custom_call.1} parent=0
    _
  %s7 = ssub.s32 1, %s5
  %s8 = scalar_select 0, %s7, %s5
  $region1: #{tpu_custom_call.1} parent=0
    #allocation5 [shape = 'u8[131072]{0}', space=vmem, size = 0x20000, scoped, tag = 'input window, operand 0']
    #allocation6 [shape = 's32[2]{0}', space=sflag, size = 0x8, scoped, tag = 'scoped memory for tpu_custom_call.1']
    #allocation7 [shape = 's32[2]{0}', space=sflag, size = 0x8, scoped, tag = 'scoped memory for tpu_custom_call.1']
    #allocation8 [shape = 'u8[32768]{0}', space=vmem, size = 0x8000, scoped, tag = 'input window, operand 1']
    #allocation9 [shape = 's32[2]{0}', space=sflag, size = 0x8, scoped, tag = 'scoped memory for tpu_custom_call.1']
    #allocation10 [shape = 'u8[2048]{0}', space=vmem, size = 0x800, scoped, tag = 'output window, operand 0']
    #allocation11 [shape = 'u8[2048]{0}', space=vmem, size = 0x800, scoped, tag = 'output window, operand 1']
    #allocation12 [shape = 's32[2]{0}', space=sflag, size = 0x8, scoped, tag = 'scoped memory for tpu_custom_call.1']
    %9 = vsyncpa [#allocation6], 0
    %s10 = scalar_lea.sflag [#allocation6], 1
    %11 = vsyncpa %s10, 0
    %12 = vsyncpa [#allocation9], 0
    %s13 = scalar_lea.sflag [#allocation9], 1
    %14 = vsyncpa %s13, 0
    %15 = vsyncpa [#allocation7], 0
    %s16 = scalar_lea.sflag [#allocation7], 1
    %17 = vsyncpa %s16, 0
    %18 = vsyncpa [#allocation12], 0
    %s19 = scalar_lea.sflag [#allocation12], 1
    %20 = vsyncpa %s19, 0
    loop: start=0, step=1, limit=6
    $region2: #{tpu_custom_call.1} parent=1 // loop_pre_header
      _
    $region3: #{tpu_custom_call.1} parent=1 // loop_header
      %s22 = sphi 0, %s26
      %p23 = scmp.ge.s32.totalorder %s22, 6
      %s29 = sphi 0, %s41
      %s30 = sphi 0, %s37
      %s31 = sphi 0, %s29
      %s32 = sphi 0, %s30
      %s33 = sphi 0, %s31
      %s34 = sphi 0, %s32
      %s46 = sphi 0, %s48
      %s49 = sphi 0, %s46
      %s50 = sphi 0, %s49
      %s66 = sphi 0, %s50
      %s74 = sphi 0, %s76
      %s77 = sphi 0, %s74
      %s78 = sphi 0, %s77
      %s94 = sphi 0, %s78
      %s100 = sphi 0, %s102
      %s103 = sphi 0, %s100
      %s104 = sphi 0, %s103
      %s120 = sphi 0, %s104
      %s126 = sphi 0, %s128
      %s129 = sphi 0, %s126
      %s130 = sphi 0, %s129
      %s146 = sphi 0, %s130
    $region4: #{tpu_custom_call.1} parent=1 // loop_header_branch
      %25 = sbr.rel (%p23) target = $region8
    $region5: #{tpu_custom_call.1} parent=1 // loop_body
      %s27 = ssub.s32 %s22, 1
      %s28 = ssub.s32 %s22, 2
      %s35 = sadd.s32 1, %s30
      %p36 = scmp.ge.s32.totalorder %s35, 2
      %s37 = scalar_select %p36, 0, %s35
      %s38 = sadd.s32 1, %s29
      %s39 = scalar_select %p36, %s38, %s29
      %p40 = scmp.ge.s32.totalorder %s39, 2
      %s41 = scalar_select %p40, 0, %s39
      %s42 = ssub.s32 %s30, %s37
      %s43 = ssub.s32 %s29, %s41
      %s44 = sor.u32 %s42, %s43
      %p45 = scmp.eq.s32.totalorder %s44, 0
      %s47 = sadd.s32 %s46, 1
      %s48 = scalar_select %p45, %s46, %s47
      %p51 = pneg %p45
      %p52 = scmp.eq.s32.totalorder %s22, 3
      %p53 = por %p51, %p52
      %p54 = scmp.ne.s32.totalorder %s46, %s49
      %p55 = scmp.eq.s32.totalorder %s22, 0
      %p56 = por %p54, %p55
      %p57 = scmp.ne.s32.totalorder %s46, %s49
      %p58 = scmp.eq.s32.totalorder %s27, 3
      %p59 = por %p57, %p58
      %p60 = scmp.ne.s32.totalorder %s49, %s50
      %p61 = scmp.eq.s32.totalorder %s27, 0
      %p62 = por %p60, %p61
      %p63 = scmp.ne.s32.totalorder %s49, %s50
      %p64 = scmp.eq.s32.totalorder %s28, 3
      %p65 = por %p63, %p64
      %p67 = scmp.ne.s32.totalorder %s50, %s66
      %p68 = scmp.eq.s32.totalorder %s28, 0
      %p69 = por %p67, %p68
      %s70 = ssub.s32 %s30, %s37
      %s71 = ssub.s32 %s29, %s41
      %s72 = sor.u32 %s70, %s71
      %p73 = scmp.eq.s32.totalorder %s72, 0
      %s75 = sadd.s32 %s74, 1
      %s76 = scalar_select %p73, %s74, %s75
      %p79 = pneg %p73
      %p80 = scmp.eq.s32.totalorder %s22, 3
      %p81 = por %p79, %p80
      %p82 = scmp.ne.s32.totalorder %s74, %s77
      %p83 = scmp.eq.s32.totalorder %s22, 0
      %p84 = por %p82, %p83
      %p85 = scmp.ne.s32.totalorder %s74, %s77
      %p86 = scmp.eq.s32.totalorder %s27, 3
      %p87 = por %p85, %p86
      %p88 = scmp.ne.s32.totalorder %s77, %s78
      %p89 = scmp.eq.s32.totalorder %s27, 0
      %p90 = por %p88, %p89
      %p91 = scmp.ne.s32.totalorder %s77, %s78
      %p92 = scmp.eq.s32.totalorder %s28, 3
      %p93 = por %p91, %p92
      %p95 = scmp.ne.s32.totalorder %s78, %s94
      %p96 = scmp.eq.s32.totalorder %s28, 0
      %p97 = por %p95, %p96
      %s98 = ssub.s32 %s29, %s41
      %p99 = scmp.eq.s32.totalorder %s98, 0
      %s101 = sadd.s32 %s100, 1
      %s102 = scalar_select %p99, %s100, %s101
      %p105 = pneg %p99
      %p106 = scmp.eq.s32.totalorder %s22, 3
      %p107 = por %p105, %p106
      %p108 = scmp.ne.s32.totalorder %s100, %s103
      %p109 = scmp.eq.s32.totalorder %s22, 0
      %p110 = por %p108, %p109
      %p111 = scmp.ne.s32.totalorder %s100, %s103
      %p112 = scmp.eq.s32.totalorder %s27, 3
      %p113 = por %p111, %p112
      %p114 = scmp.ne.s32.totalorder %s103, %s104
      %p115 = scmp.eq.s32.totalorder %s27, 0
      %p116 = por %p114, %p115
      %p117 = scmp.ne.s32.totalorder %s103, %s104
      %p118 = scmp.eq.s32.totalorder %s28, 3
      %p119 = por %p117, %p118
      %p121 = scmp.ne.s32.totalorder %s104, %s120
      %p122 = scmp.eq.s32.totalorder %s28, 0
      %p123 = por %p121, %p122
      %s124 = ssub.s32 %s29, %s41
      %p125 = scmp.eq.s32.totalorder %s124, 0
      %s127 = sadd.s32 %s126, 1
      %s128 = scalar_select %p125, %s126, %s127
      %p131 = pneg %p125
      %p132 = scmp.eq.s32.totalorder %s22, 3
      %p133 = por %p131, %p132
      %p134 = scmp.ne.s32.totalorder %s126, %s129
      %p135 = scmp.eq.s32.totalorder %s22, 0
      %p136 = por %p134, %p135
      %p137 = scmp.ne.s32.totalorder %s126, %s129
      %p138 = scmp.eq.s32.totalorder %s27, 3
      %p139 = por %p137, %p138
      %p140 = scmp.ne.s32.totalorder %s129, %s130
      %p141 = scmp.eq.s32.totalorder %s27, 0
      %p142 = por %p140, %p141
      %p143 = scmp.ne.s32.totalorder %s129, %s130
      %p144 = scmp.eq.s32.totalorder %s28, 3
      %p145 = por %p143, %p144
      %p147 = scmp.ne.s32.totalorder %s130, %s146
      %p148 = scmp.eq.s32.totalorder %s28, 0
      %p149 = por %p147, %p148
      %p150 = scmp.le.s32.totalorder 1, %s22
      %p151 = scmp.lt.s32.totalorder %s22, 5
      %p152 = pnand %p150, %p151
      %p153 = pneg %p152
      // Predicated region
      $region9: #{tpu_custom_call.1} parent=5 // pred_check
        _
      $region10: #{tpu_custom_call.1} parent=5 // pred_check_branch
        %155 = sbr.rel (%p152) target = $region12
      $region11: #{tpu_custom_call.1} parent=5 // pred_region
        %s156 = ssub.s32 %s22, 1
      $region12: #{tpu_custom_call.1} parent=5 // pred_fallthru
        _
      %p157 = scmp.lt.s32.totalorder %s22, 4
      // Predicated region
      $region13: #{tpu_custom_call.1} parent=5 // pred_check
        %p158 = pneg %p157
      $region14: #{tpu_custom_call.1} parent=5 // pred_check_branch
        %160 = sbr.rel (%p158) target = $region16
      $region15: #{tpu_custom_call.1} parent=5 // pred_region
        // Predicated region
        $region17: #{tpu_custom_call.1} parent=15 // pred_check
          %p161 = pneg %p56
        $region18: #{tpu_custom_call.1} parent=15 // pred_check_branch
          %163 = sbr.rel (%p161) target = $region20
        $region19: #{tpu_custom_call.1} parent=15 // pred_region
          %s164 = sand.u32 %s46, 1
          %s165 = scalar_lea.sflag [#allocation6], %s164
          %s166 = sand.u32 %s46, 1
          %s167 = smul.addr %s166, 128
          %s168 = scalar_lea.vmem [#allocation5], %s167
          %s169 = smul.u32 8, %s30
          %s170 = smul.u32 2, %s29
          %s172 = ssub.s32 2048, 2048
          %173 = vsyncadd %s165, %s172
          %s174 = smul.addr %s169, 4
          %s175 = sadd.s32 %s170, %s174
          %s176 = smul.addr %s175, 128
          %s177 = scalar_lea.hbm %s0, %s176
          %s178 = sshll.u32 %s168, 4
          %s179 = int_to_ptr.vmem [resolvable:$true] %s178
          %184 = dma.hbm_to_vmem [thread:$0]  %s177, 2048, %s179, %s165, 512, 256, 16
        $region20: #{tpu_custom_call.1} parent=15 // pred_fallthru
          _
        // Predicated region
        $region21: #{tpu_custom_call.1} parent=15 // pred_check
          %p185 = pneg %p84
        $region22: #{tpu_custom_call.1} parent=15 // pred_check_branch
          %187 = sbr.rel (%p185) target = $region24
        $region23: #{tpu_custom_call.1} parent=15 // pred_region
          %s188 = sand.u32 %s74, 1
          %s189 = scalar_lea.sflag [#allocation9], %s188
          %s190 = sand.u32 %s74, 1
          %s191 = smul.addr %s190, 32
          %s192 = scalar_lea.vmem [#allocation8], %s191
          %s193 = smul.u32 2, %s30
          %s194 = smul.u32 2, %s29
          %s196 = ssub.s32 512, 512
          %197 = vsyncadd %s189, %s196
          %s198 = smul.addr %s193, 4
          %s199 = sadd.s32 %s194, %s198
          %s200 = smul.addr %s199, 128
          %s201 = scalar_lea.hbm %s1, %s200
          %s202 = sshll.u32 %s192, 4
          %s203 = int_to_ptr.vmem [resolvable:$true] %s202
          %208 = dma.hbm_to_vmem [thread:$0]  %s201, 512, %s203, %s189, 512, 256, 16
        $region24: #{tpu_custom_call.1} parent=15 // pred_fallthru
          _
      $region16: #{tpu_custom_call.1} parent=5 // pred_fallthru
        _
      %p209 = scmp.le.s32.totalorder 1, %s22
      %p210 = scmp.lt.s32.totalorder %s22, 5
      %p211 = pnand %p209, %p210
      %p212 = pneg %p211
      // Predicated region
      $region25: #{tpu_custom_call.1} parent=5 // pred_check
        _
      $region26: #{tpu_custom_call.1} parent=5 // pred_check_branch
        %214 = sbr.rel (%p211) target = $region28
      $region27: #{tpu_custom_call.1} parent=5 // pred_region
        %s215 = ssub.s32 %s22, 1
        %s216 = sand.u32 %s49, 1
        %s217 = scalar_lea.sflag [#allocation6], %s216
        %s218 = sand.u32 %s49, 1
        %s219 = smul.addr %s218, 128
        %s220 = scalar_lea.vmem [#allocation5], %s219
        // Predicated region
        $region29: #{tpu_custom_call.1} parent=27 // pred_check
          %p221 = pneg %p62
        $region30: #{tpu_custom_call.1} parent=27 // pred_check_branch
          %223 = sbr.rel (%p221) target = $region32
        $region31: #{tpu_custom_call.1} parent=27 // pred_region
          %224 = dma.done %s217, 2048
        $region32: #{tpu_custom_call.1} parent=27 // pred_fallthru
          _
        %s225 = sand.u32 %s77, 1
        %s226 = scalar_lea.sflag [#allocation9], %s225
        %s227 = sand.u32 %s77, 1
        %s228 = smul.addr %s227, 32
        %s229 = scalar_lea.vmem [#allocation8], %s228
        // Predicated region
        $region33: #{tpu_custom_call.1} parent=27 // pred_check
          %p230 = pneg %p90
        $region34: #{tpu_custom_call.1} parent=27 // pred_check_branch
          %232 = sbr.rel (%p230) target = $region36
        $region35: #{tpu_custom_call.1} parent=27 // pred_region
          %233 = dma.done %s226, 512
        $region36: #{tpu_custom_call.1} parent=27 // pred_fallthru
          _
        %s234 = sand.u32 %s49, 1
        %s235 = scalar_lea.sflag [#allocation6], %s234
        %s236 = sand.u32 %s49, 1
        %s237 = smul.addr %s236, 128
        %s238 = scalar_lea.vmem [#allocation5], %s237
        %p239 = pneg %p62
        %p240 = pneg %p59
        %s241 = sand.u32 %s77, 1
        %s242 = scalar_lea.sflag [#allocation9], %s241
        %s243 = sand.u32 %s77, 1
        %s244 = smul.addr %s243, 32
        %s245 = scalar_lea.vmem [#allocation8], %s244
        %p246 = pneg %p90
        %p247 = pneg %p87
        %p248 = pneg %p116
        %p249 = pneg %p113
        %s250 = sand.u32 %s103, 1
        %s251 = scalar_lea.sflag [#allocation7], %s250
        %s252 = sand.u32 %s103, 1
        %s253 = smul.addr %s252, 2
        %s254 = scalar_lea.vmem [#allocation10], %s253
        %p255 = pneg %p142
        %p256 = pneg %p139
        %s257 = sand.u32 %s129, 1
        %s258 = scalar_lea.sflag [#allocation12], %s257
        %s259 = sand.u32 %s129, 1
        %s260 = smul.addr %s259, 2
        %s261 = scalar_lea.vmem [#allocation11], %s260
        %s262 = smul.u32 8, %s32
        %s263 = smul.u32 2, %s31
        %s264 = smul.u32 2, %s32
        %s265 = smul.u32 2, %s31
        %s266 = smul.u32 2, %s31
        %s267 = smul.u32 2, %s31
        %p270 = scmp.eq.s32.totalorder %s32, 0
        // Predicated region
        $region37: #{tpu_custom_call.1} parent=27 // pred_check
          %p271 = pneg %p270
        $region38: #{tpu_custom_call.1} parent=27 // pred_check_branch
          %273 = sbr.rel (%p271) target = $region40
        $region39: #{tpu_custom_call.1} parent=27 // pred_region
          %v274 = vlaneseq
          %vm275 = vcmp.ge.s32.totalorder %v274, 0
          %vm276 = vcmp.lt.s32.totalorder %v274, 256
          %vm277 = vmand %vm275, %vm276
          %278 = vst.msk [vmem:[#allocation2] sm:$0x3] %vm277, -inf
          %279 = vst.msk [vmem:[#allocation3] sm:$0x3] %vm277, 0.0
          %280 = vst.msk [vmem:[#allocation4] sm:$0x3] %vm277, 0.0
        $region40: #{tpu_custom_call.1} parent=27 // pred_fallthru
          _
        %v281 = vld [vmem:[%s220] sm:$0xff]
        %v282 = vld [vmem:[%s220 + $0x8] sm:$0xff]
        %v283 = vld [vmem:[%s220 + $0x10] sm:$0xff]
        %v284 = vld [vmem:[%s220 + $0x18] sm:$0xff]
        %v285 = vld [vmem:[%s220 + $0x20] sm:$0xff]
        %v286 = vld [vmem:[%s220 + $0x28] sm:$0xff]
        %v287 = vld [vmem:[%s220 + $0x30] sm:$0xff]
        %v288 = vld [vmem:[%s220 + $0x38] sm:$0xff]
        %v289 = vld [vmem:[%s220 + $0x40] sm:$0xff]
        %v290 = vld [vmem:[%s220 + $0x48] sm:$0xff]
        %v291 = vld [vmem:[%s220 + $0x50] sm:$0xff]
        %v292 = vld [vmem:[%s220 + $0x58] sm:$0xff]
        %v293 = vld [vmem:[%s220 + $0x60] sm:$0xff]
        %v294 = vld [vmem:[%s220 + $0x68] sm:$0xff]
        %v295 = vld [vmem:[%s220 + $0x70] sm:$0xff]
        %v296 = vld [vmem:[%s220 + $0x78] sm:$0xff]
        %v297 = vmul.f32 %v281, 5.0
        %v298 = vmul.f32 %v282, 5.0
        %v299 = vmul.f32 %v283, 5.0
        %v300 = vmul.f32 %v284, 5.0
        %v301 = vmul.f32 %v285, 5.0
        %v302 = vmul.f32 %v286, 5.0
        %v303 = vmul.f32 %v287, 5.0
        %v304 = vmul.f32 %v288, 5.0
        %v305 = vmul.f32 %v289, 5.0
        %v306 = vmul.f32 %v290, 5.0
        %v307 = vmul.f32 %v291, 5.0
        %v308 = vmul.f32 %v292, 5.0
        %v309 = vmul.f32 %v293, 5.0
        %v310 = vmul.f32 %v294, 5.0
        %v311 = vmul.f32 %v295, 5.0
        %v312 = vmul.f32 %v296, 5.0
        %v313 = vld [vmem:[%s229] sm:$0xff]
        %v314 = vld [vmem:[%s229 + $0x8] sm:$0xff]
        %v315 = vld [vmem:[%s229 + $0x10] sm:$0xff]
        %v316 = vld [vmem:[%s229 + $0x18] sm:$0xff]
        %vm317 = vnez %v313
        %vm318 = vnez %v314
        %vm319 = vnez %v315
        %vm320 = vnez %v316
        %v321 = vsel %vm317, 16843009, 0
        %v322 = vsel %vm318, 16843009, 0
        %v323 = vsel %vm319, 16843009, 0
        %v324 = vsel %vm320, 16843009, 0
        %v325 = vunpack.c.0.s8 %v321
        %v326 = vunpack.c.0.s8 %v322
        %v327 = vunpack.c.1.s8 %v321
        %v328 = vunpack.c.1.s8 %v322
        %v329 = vunpack.c.2.s8 %v321
        %v330 = vunpack.c.2.s8 %v322
        %v331 = vunpack.c.3.s8 %v321
        %v332 = vunpack.c.3.s8 %v322
        %v333 = vunpack.c.0.s8 %v323
        %v334 = vunpack.c.0.s8 %v324
        %v335 = vunpack.c.1.s8 %v323
        %v336 = vunpack.c.1.s8 %v324
        %v337 = vunpack.c.2.s8 %v323
        %v338 = vunpack.c.2.s8 %v324
        %v339 = vunpack.c.3.s8 %v323
        %v340 = vunpack.c.3.s8 %v324
        %v341 = vpack.c.b16 %v326, %v325
        %v342 = vpack.c.b8 %v341, %v341
        %v343 = vpack.c.b16 %v328, %v327
        %v344 = vpack.c.b8 %v343, %v343
        %v345 = vpack.c.b16 %v330, %v329
        %v346 = vpack.c.b8 %v345, %v345
        %v347 = vpack.c.b16 %v332, %v331
        %v348 = vpack.c.b8 %v347, %v347
        %v349 = vpack.c.b16 %v334, %v333
        %v350 = vpack.c.b8 %v349, %v349
        %v351 = vpack.c.b16 %v336, %v335
        %v352 = vpack.c.b8 %v351, %v351
        %v353 = vpack.c.b16 %v338, %v337
        %v354 = vpack.c.b8 %v353, %v353
        %v355 = vpack.c.b16 %v340, %v339
        %v356 = vpack.c.b8 %v355, %v355
        %vm357 = vnez %v342
        %vm358 = vnez %v344
        %vm359 = vnez %v346
        %vm360 = vnez %v348
        %vm361 = vnez %v350
        %vm362 = vnez %v352
        %vm363 = vnez %v354
        %vm364 = vnez %v356
        %v365 = vsel %vm357, 16843009, 0
        %v366 = vsel %vm358, 16843009, 0
        %v367 = vsel %vm359, 16843009, 0
        %v368 = vsel %vm360, 16843009, 0
        %v369 = vsel %vm361, 16843009, 0
        %v370 = vsel %vm362, 16843009, 0
        %v371 = vsel %vm363, 16843009, 0
        %v372 = vsel %vm364, 16843009, 0
        %v373 = vunpack.c.0.s8 %v365
        %v374 = vunpack.c.1.s8 %v365
        %v375 = vunpack.c.0.s8 %v366
        %v376 = vunpack.c.1.s8 %v366
        %v377 = vunpack.c.0.s8 %v367
        %v378 = vunpack.c.1.s8 %v367
        %v379 = vunpack.c.0.s8 %v368
        %v380 = vunpack.c.1.s8 %v368
        %v381 = vunpack.c.0.s8 %v369
        %v382 = vunpack.c.1.s8 %v369
        %v383 = vunpack.c.0.s8 %v370
        %v384 = vunpack.c.1.s8 %v370
        %v385 = vunpack.c.0.s8 %v371
        %v386 = vunpack.c.1.s8 %v371
        %v387 = vunpack.c.0.s8 %v372
        %v388 = vunpack.c.1.s8 %v372
        %vm389 = vcmp.ne.s32.totalorder %v373, 0
        %vm390 = vcmp.ne.s32.totalorder %v374, 0
        %vm391 = vcmp.ne.s32.totalorder %v375, 0
        %vm392 = vcmp.ne.s32.totalorder %v376, 0
        %vm393 = vcmp.ne.s32.totalorder %v377, 0
        %vm394 = vcmp.ne.s32.totalorder %v378, 0
        %vm395 = vcmp.ne.s32.totalorder %v379, 0
        %vm396 = vcmp.ne.s32.totalorder %v380, 0
        %vm397 = vcmp.ne.s32.totalorder %v381, 0
        %vm398 = vcmp.ne.s32.totalorder %v382, 0
        %vm399 = vcmp.ne.s32.totalorder %v383, 0
        %vm400 = vcmp.ne.s32.totalorder %v384, 0
        %vm401 = vcmp.ne.s32.totalorder %v385, 0
        %vm402 = vcmp.ne.s32.totalorder %v386, 0
        %vm403 = vcmp.ne.s32.totalorder %v387, 0
        %vm404 = vcmp.ne.s32.totalorder %v388, 0
        %v405 = vsel %vm389, %v297, 0.0
        %v406 = vsel %vm390, %v298, 0.0
        %v407 = vsel %vm391, %v299, 0.0
        %v408 = vsel %vm392, %v300, 0.0
        %v409 = vsel %vm393, %v301, 0.0
        %v410 = vsel %vm394, %v302, 0.0
        %v411 = vsel %vm395, %v303, 0.0
        %v412 = vsel %vm396, %v304, 0.0
        %v413 = vsel %vm397, %v305, 0.0
        %v414 = vsel %vm398, %v306, 0.0
        %v415 = vsel %vm399, %v307, 0.0
        %v416 = vsel %vm400, %v308, 0.0
        %v417 = vsel %vm401, %v309, 0.0
        %v418 = vsel %vm402, %v310, 0.0
        %v419 = vsel %vm403, %v311, 0.0
        %v420 = vsel %vm404, %v312, 0.0
        %v421 = vld [vmem:[#allocation4] sm:$0x3]
        %v422 = vadd.f32 %v405, %v407
        %v423 = vadd.f32 %v422, %v409
        %v424 = vadd.f32 %v423, %v411
        %v425 = vadd.f32 %v424, %v413
        %v426 = vadd.f32 %v425, %v415
        %v427 = vadd.f32 %v426, %v417
        %v428 = vadd.f32 %v427, %v419
        %v429 = vrot.slane %v428, 4
        %v430 = vadd.f32 %v428, %v429
        %v431 = vrot.slane %v430, 2
        %v432 = vadd.f32 %v430, %v431
        %v433 = vrot.slane %v432, 1
        %v434 = vadd.f32 %v432, %v433
        %v435 = vadd.f32 %v406, %v408
        %v436 = vadd.f32 %v435, %v410
        %v437 = vadd.f32 %v436, %v412
        %v438 = vadd.f32 %v437, %v414
        %v439 = vadd.f32 %v438, %v416
        %v440 = vadd.f32 %v439, %v418
        %v441 = vadd.f32 %v440, %v420
        %v442 = vrot.slane %v441, 4
        %v443 = vadd.f32 %v441, %v442
        %v444 = vrot.slane %v443, 2
        %v445 = vadd.f32 %v443, %v444
        %v446 = vrot.slane %v445, 1
        %v447 = vadd.f32 %v445, %v446
        %v450 = vcombine.low %v434, %v447
        %v452 = vunpack.c.l.s4 1966171168
        %v453 = vunpack.c.0.s8 %v452
        %v454 = vlaneseq
        %v455 = vshrl.u32 %v454, 7
        %v456 = vsub.s32 %v453, %v455
        %v457 = vrot.slane %v450, %v456
        %v459 = vunpack.c.l.s4 1966171168
        %v460 = vunpack.c.0.s8 %v459
        %v461 = vlaneseq
        %v462 = vshrl.u32 %v461, 7
        %v463 = vsub.s32 %v460, %v462
        %v464 = vrot.slane %v457, %v463
        %v466 = vadd.f32 %v421, %v464
        %v467 = vlaneseq
        %vm468 = vcmp.ge.s32.totalorder %v467, 0
        %vm469 = vcmp.lt.s32.totalorder %v467, 256
        %vm470 = vmand %vm468, %vm469
        %471 = vst.msk [vmem:[#allocation4] sm:$0x3] %vm470, %v466
        %v472 = vsel %vm389, 0.0, %v297
        %v473 = vsel %vm390, 0.0, %v298
        %v474 = vsel %vm391, 0.0, %v299
        %v475 = vsel %vm392, 0.0, %v300
        %v476 = vsel %vm393, 0.0, %v301
        %v477 = vsel %vm394, 0.0, %v302
        %v478 = vsel %vm395, 0.0, %v303
        %v479 = vsel %vm396, 0.0, %v304
        %v480 = vsel %vm397, 0.0, %v305
        %v481 = vsel %vm398, 0.0, %v306
        %v482 = vsel %vm399, 0.0, %v307
        %v483 = vsel %vm400, 0.0, %v308
        %v484 = vsel %vm401, 0.0, %v309
        %v485 = vsel %vm402, 0.0, %v310
        %v486 = vsel %vm403, 0.0, %v311
        %v487 = vsel %vm404, 0.0, %v312
        %v488 = vmax.f32 %v472, %v476
        %v489 = vmax.f32 %v474, %v478
        %v490 = vmax.f32 %v488, %v480
        %v491 = vmax.f32 %v489, %v482
        %v492 = vmax.f32 %v490, %v484
        %v493 = vmax.f32 %v491, %v486
        %v494 = vmax.f32 %v492, %v493
        %v495 = vrot.slane %v494, 4
        %v496 = vmax.f32 %v494, %v495
        %v497 = vrot.slane %v496, 2
        %v498 = vmax.f32 %v496, %v497
        %v499 = vrot.slane %v498, 1
        %v500 = vmax.f32 %v498, %v499
        %v501 = vmax.f32 %v473, %v477
        %v502 = vmax.f32 %v475, %v479
        %v503 = vmax.f32 %v501, %v481
        %v504 = vmax.f32 %v502, %v483
        %v505 = vmax.f32 %v503, %v485
        %v506 = vmax.f32 %v504, %v487
        %v507 = vmax.f32 %v505, %v506
        %v508 = vrot.slane %v507, 4
        %v509 = vmax.f32 %v507, %v508
        %v510 = vrot.slane %v509, 2
        %v511 = vmax.f32 %v509, %v510
        %v512 = vrot.slane %v511, 1
        %v513 = vmax.f32 %v511, %v512
        %v514 = vld [vmem:[#allocation2] sm:$0x3]
        %v517 = vcombine.low %v500, %v513
        %v519 = vunpack.c.l.s4 1966171168
        %v520 = vunpack.c.0.s8 %v519
        %v521 = vlaneseq
        %v522 = vshrl.u32 %v521, 7
        %v523 = vsub.s32 %v520, %v522
        %v524 = vrot.slane %v517, %v523
        %v526 = vunpack.c.l.s4 1966171168
        %v527 = vunpack.c.0.s8 %v526
        %v528 = vlaneseq
        %v529 = vshrl.u32 %v528, 7
        %v530 = vsub.s32 %v527, %v529
        %v531 = vrot.slane %v524, %v530
        %v533 = vmax.f32 %v514, %v531
        %v534 = vsub.f32 %v514, %v533
        %v535 = vmul.f32 %v534, 1.442695
        %v536 = vpow.pop %v535
        %v537 = vld [vmem:[#allocation3] sm:$0x3]
        %v538 = vmul.f32 %v536, %v537
        %v540 = vlaneseq
        %v541 = vshrl.u32 %v540, 7
        %v542 = vsub.s32 0, %v541
        %v543 = vrot.slane %v533, %v542
        %v544 = vlaneseq
        %v545 = vshrl.u32 %v544, 7
        %v546 = vsub.s32 1, %v545
        %v547 = vrot.slane %v533, %v546
        %v550 = vsub.f32 %v472, %v543
        %v551 = vsub.f32 %v473, %v547
        %v552 = vsub.f32 %v474, %v543
        %v553 = vsub.f32 %v475, %v547
        %v554 = vsub.f32 %v476, %v543
        %v555 = vsub.f32 %v477, %v547
        %v556 = vsub.f32 %v478, %v543
        %v557 = vsub.f32 %v479, %v547
        %v558 = vsub.f32 %v480, %v543
        %v559 = vsub.f32 %v481, %v547
        %v560 = vsub.f32 %v482, %v543
        %v561 = vsub.f32 %v483, %v547
        %v562 = vsub.f32 %v484, %v543
        %v563 = vsub.f32 %v485, %v547
        %v564 = vsub.f32 %v486, %v543
        %v565 = vsub.f32 %v487, %v547
        %v566 = vmul.f32 %v550, 1.442695
        %v567 = vpow.pop %v566
        %v568 = vmul.f32 %v551, 1.442695
        %v569 = vpow.pop %v568
        %v570 = vmul.f32 %v552, 1.442695
        %v571 = vpow.pop %v570
        %v572 = vmul.f32 %v553, 1.442695
        %v573 = vpow.pop %v572
        %v574 = vmul.f32 %v554, 1.442695
        %v575 = vpow.pop %v574
        %v576 = vmul.f32 %v555, 1.442695
        %v577 = vpow.pop %v576
        %v578 = vmul.f32 %v556, 1.442695
        %v579 = vpow.pop %v578
        %v580 = vmul.f32 %v557, 1.442695
        %v581 = vpow.pop %v580
        %v582 = vmul.f32 %v558, 1.442695
        %v583 = vpow.pop %v582
        %v584 = vmul.f32 %v559, 1.442695
        %v585 = vpow.pop %v584
        %v586 = vmul.f32 %v560, 1.442695
        %v587 = vpow.pop %v586
        %v588 = vmul.f32 %v561, 1.442695
        %v589 = vpow.pop %v588
        %v590 = vmul.f32 %v562, 1.442695
        %v591 = vpow.pop %v590
        %v592 = vmul.f32 %v563, 1.442695
        %v593 = vpow.pop %v592
        %v594 = vmul.f32 %v564, 1.442695
        %v595 = vpow.pop %v594
        %v596 = vmul.f32 %v565, 1.442695
        %v597 = vpow.pop %v596
        %v598 = vadd.f32 %v567, %v571
        %v599 = vadd.f32 %v598, %v575
        %v600 = vadd.f32 %v599, %v579
        %v601 = vadd.f32 %v600, %v583
        %v602 = vadd.f32 %v601, %v587
        %v603 = vadd.f32 %v602, %v591
        %v604 = vadd.f32 %v603, %v595
        %v605 = vrot.slane %v604, 4
        %v606 = vadd.f32 %v604, %v605
        %v607 = vrot.slane %v606, 2
        %v608 = vadd.f32 %v606, %v607
        %v609 = vrot.slane %v608, 1
        %v610 = vadd.f32 %v608, %v609
        %v611 = vadd.f32 %v569, %v573
        %v612 = vadd.f32 %v611, %v577
        %v613 = vadd.f32 %v612, %v581
        %v614 = vadd.f32 %v613, %v585
        %v615 = vadd.f32 %v614, %v589
        %v616 = vadd.f32 %v615, %v593
        %v617 = vadd.f32 %v616, %v597
        %v618 = vrot.slane %v617, 4
        %v619 = vadd.f32 %v617, %v618
        %v620 = vrot.slane %v619, 2
        %v621 = vadd.f32 %v619, %v620
        %v622 = vrot.slane %v621, 1
        %v623 = vadd.f32 %v621, %v622
        %v626 = vcombine.low %v610, %v623
        %v628 = vunpack.c.l.s4 1966171168
        %v629 = vunpack.c.0.s8 %v628
        %v630 = vlaneseq
        %v631 = vshrl.u32 %v630, 7
        %v632 = vsub.s32 %v629, %v631
        %v633 = vrot.slane %v626, %v632
        %v635 = vunpack.c.l.s4 1966171168
        %v636 = vunpack.c.0.s8 %v635
        %v637 = vlaneseq
        %v638 = vshrl.u32 %v637, 7
        %v639 = vsub.s32 %v636, %v638
        %v640 = vrot.slane %v633, %v639
        %v642 = vadd.f32 %v538, %v640
        %643 = vst.msk [vmem:[#allocation3] sm:$0x3] %vm470, %v642
        %644 = vst.msk [vmem:[#allocation2] sm:$0x3] %vm470, %v533
        %p645 = scmp.eq.s32.totalorder %s32, 1
        // Predicated region
        $region41: #{tpu_custom_call.1} parent=27 // pred_check
          %p646 = pneg %p645
        $region42: #{tpu_custom_call.1} parent=27 // pred_check_branch
          %648 = sbr.rel (%p646) target = $region44
        $region43: #{tpu_custom_call.1} parent=27 // pred_region
          %v649 = vld [vmem:[#allocation2] sm:$0x3]
          %v650 = vld [vmem:[#allocation3] sm:$0x3]
          %v651 = vlog2.pop %v650
          %v652 = vmul.f32 %v651, 0.6931472
          %v653 = vadd.f32 %v649, %v652
          %654 = vst.msk [vmem:[%s254] sm:$0x3] %vm470, %v653
          %v655 = vld [vmem:[#allocation4] sm:$0x3]
          %656 = vst.msk [vmem:[%s261] sm:$0x3] %vm470, %v655
        $region44: #{tpu_custom_call.1} parent=27 // pred_fallthru
          _
        %s657 = sand.u32 %s103, 1
        %s658 = scalar_lea.sflag [#allocation7], %s657
        %s659 = sand.u32 %s103, 1
        %s660 = smul.addr %s659, 2
        %s661 = scalar_lea.vmem [#allocation10], %s660
        %s662 = sand.u32 %s129, 1
        %s663 = scalar_lea.sflag [#allocation12], %s662
        %s664 = sand.u32 %s129, 1
        %s665 = smul.addr %s664, 2
        %s666 = scalar_lea.vmem [#allocation11], %s665
        // Predicated region
        $region45: #{tpu_custom_call.1} parent=27 // pred_check
          %p667 = pneg %p113
        $region46: #{tpu_custom_call.1} parent=27 // pred_check_branch
          %669 = sbr.rel (%p667) target = $region48
        $region47: #{tpu_custom_call.1} parent=27 // pred_region
          %s670 = smul.u32 2, %s31
          %s672 = ssub.s32 32, 32
          %673 = vsyncadd %s658, %s672
          %s674 = smul.addr %s670, 16
          %s675 = scalar_lea.hbm %s2, %s674
          %s677 = sshll.u32 %s661, 4
          %s678 = int_to_ptr.vmem [resolvable:$true] %s677
          %680 = dma.vmem_to_hbm [thread:$0]  %s678, 32, %s675, %s658
        $region48: #{tpu_custom_call.1} parent=27 // pred_fallthru
          _
        // Predicated region
        $region49: #{tpu_custom_call.1} parent=27 // pred_check
          %p681 = pneg %p139
        $region50: #{tpu_custom_call.1} parent=27 // pred_check_branch
          %683 = sbr.rel (%p681) target = $region52
        $region51: #{tpu_custom_call.1} parent=27 // pred_region
          %s684 = smul.u32 2, %s31
          %s686 = ssub.s32 32, 32
          %687 = vsyncadd %s663, %s686
          %s688 = smul.addr %s684, 16
          %s689 = scalar_lea.hbm %s3, %s688
          %s691 = sshll.u32 %s666, 4
          %s692 = int_to_ptr.vmem [resolvable:$true] %s691
          %694 = dma.vmem_to_hbm [thread:$0]  %s692, 32, %s689, %s663
        $region52: #{tpu_custom_call.1} parent=27 // pred_fallthru
          _
      $region28: #{tpu_custom_call.1} parent=5 // pred_fallthru
        _
      %p695 = scmp.le.s32.totalorder 2, %s22
      // Predicated region
      $region53: #{tpu_custom_call.1} parent=5 // pred_check
        %p696 = pneg %p695
      $region54: #{tpu_custom_call.1} parent=5 // pred_check_branch
        %698 = sbr.rel (%p696) target = $region56
      $region55: #{tpu_custom_call.1} parent=5 // pred_region
        %s699 = ssub.s32 %s22, 2
        // Predicated region
        $region57: #{tpu_custom_call.1} parent=55 // pred_check
          %p700 = pneg %p119
        $region58: #{tpu_custom_call.1} parent=55 // pred_check_branch
          %702 = sbr.rel (%p700) target = $region60
        $region59: #{tpu_custom_call.1} parent=55 // pred_region
          %s703 = sand.u32 %s104, 1
          %s704 = scalar_lea.sflag [#allocation7], %s703
          %s705 = sand.u32 %s104, 1
          %s706 = smul.addr %s705, 2
          %s707 = scalar_lea.vmem [#allocation10], %s706
          %708 = dma.done %s704, 32
        $region60: #{tpu_custom_call.1} parent=55 // pred_fallthru
          _
        // Predicated region
        $region61: #{tpu_custom_call.1} parent=55 // pred_check
          %p709 = pneg %p145
        $region62: #{tpu_custom_call.1} parent=55 // pred_check_branch
          %711 = sbr.rel (%p709) target = $region64
        $region63: #{tpu_custom_call.1} parent=55 // pred_region
          %s712 = sand.u32 %s130, 1
          %s713 = scalar_lea.sflag [#allocation12], %s712
          %s714 = sand.u32 %s130, 1
          %s715 = smul.addr %s714, 2
          %s716 = scalar_lea.vmem [#allocation11], %s715
          %717 = dma.done %s713, 32
        $region64: #{tpu_custom_call.1} parent=55 // pred_fallthru
          _
      $region56: #{tpu_custom_call.1} parent=5 // pred_fallthru
        _
    $region6: #{tpu_custom_call.1} parent=1 // loop_footer
      %s26 = sadd.s32 1, %s22
    $region7: #{tpu_custom_call.1} parent=1 // loop_footer_branch
      %21 = sbr.rel target = $region3
    $region8: #{tpu_custom_call.1} parent=1 // loop_exit
      _
    %718 = vsyncpa [#allocation6], 1
    %s719 = scalar_lea.sflag [#allocation6], 1
    %720 = vsyncpa %s719, 1
    %721 = vsyncpa [#allocation9], 1
    %s722 = scalar_lea.sflag [#allocation9], 1
    %723 = vsyncpa %s722, 1
    %724 = vsyncpa [#allocation7], 1
    %s725 = scalar_lea.sflag [#allocation7], 1
    %726 = vsyncpa %s725, 1
    %727 = vsyncpa [#allocation12], 1
    %s728 = scalar_lea.sflag [#allocation12], 1
    %729 = vsyncpa %s728, 1

</llo_original>
